<compile_context>
chip_gen: v5e
topology: v5e:2x2
jax: 0.10.0
libtpu: 0.0.40
codegen_flags: <defaults>
</compile_context>

<pallas_src>
import functools

import jax
import jax.numpy as jnp
from jax.experimental import pallas as pl
from jax.experimental.pallas import tpu as pltpu


# ----------------------------------------------------------------------------
# Tiling helpers.
# ----------------------------------------------------------------------------
def _pick_tile(full, target, align):
    """Largest tile <= target that is a multiple of `align` and divides `full`
    (falls back to the full extent)."""
    if full <= target:
        return full
    t = (target // align) * align
    while t >= align:
        if full % t == 0:
            return t
        t -= align
    return full


def _pick_seq_tile(full, requested, target):
    """Sequence-axis tile for the attention kernels.  Honors `requested` if it
    divides `full`; otherwise prefers MXU-friendly 256/128-aligned tiles
    (v6e/v7x have a 256-wide MXU), then 16/8-aligned, else the full extent."""
    if requested is not None and full % requested == 0:
        return requested
    if full <= target:
        return full
    for align in (256, 128, 16, 8):
        t = (target // align) * align
        while t >= align:
            if full % t == 0:
                return t
            t -= align
    return full


# ----------------------------------------------------------------------------
# Kernel 1: tiled linear  y = x @ W + b
# ----------------------------------------------------------------------------
def _linear_kernel(x_ref, w_ref, b_ref, o_ref, acc_ref):
    k = pl.program_id(2)

    @pl.when(k == 0)
    def _():
        acc_ref[...] = jnp.zeros(acc_ref.shape, jnp.float32)

    acc_ref[...] += jnp.dot(x_ref[...], w_ref[...],
                            preferred_element_type=jnp.float32)

    @pl.when(k == pl.num_programs(2) - 1)
    def _():
        # bias cast/broadcast only on the last K step (hoisted out of the loop)
        o_ref[...] = (acc_ref[...]
                      + b_ref[...].astype(jnp.float32)).astype(o_ref.dtype)


def linear(x, w, b, *, tm=256, tn=512, tk=512):
    """x: (N, din), w: (din, dout), b: (1, dout) -> (N, dout)."""
    n, din = x.shape
    dout = w.shape[1]
    sub_align = 16 if x.dtype.itemsize < 4 else 8   # bf16 packs 16 rows / vreg
    tm = _pick_tile(n, tm, sub_align)
    tn = _pick_tile(dout, tn, 128)
    tk = _pick_tile(din, tk, 128)
    grid = (n // tm, dout // tn, din // tk)
    return pl.pallas_call(
        _linear_kernel,
        out_shape=jax.ShapeDtypeStruct((n, dout), x.dtype),
        grid=grid,
        in_specs=[
            pl.BlockSpec((tm, tk), lambda i, j, k: (i, k)),
            pl.BlockSpec((tk, tn), lambda i, j, k: (k, j)),
            pl.BlockSpec((1, tn), lambda i, j, k: (0, j)),
        ],
        out_specs=pl.BlockSpec((tm, tn), lambda i, j, k: (i, j)),
        scratch_shapes=[pltpu.VMEM((tm, tn), jnp.float32)],
        compiler_params=pltpu.CompilerParams(
            dimension_semantics=("parallel", "parallel", "arbitrary")),
    )(x, w, b)


# ----------------------------------------------------------------------------
# Flash-style attention building blocks (all heads batched per grid step).
# ----------------------------------------------------------------------------
def _init_and_stage_q(q_ref, qs_ref, m_ref, l_ref, acc_ref, scale):
    m_ref[...] = jnp.full(m_ref.shape, -jnp.inf, jnp.float32)
    l_ref[...] = jnp.zeros(l_ref.shape, jnp.float32)
    acc_ref[...] = jnp.zeros(acc_ref.shape, jnp.float32)
    # (tq, H, hd) -> (H, tq, hd): head-major relayout on the in-VMEM block,
    # done once per (batch, q-tile).  Softmax scale folded into q here, so the
    # per-kv-step multiply over the (H, tq, tkv) scores disappears.
    q = jnp.transpose(q_ref[...], (1, 0, 2))
    qs_ref[...] = (q * scale).astype(qs_ref.dtype)


def _online_update(qs, k, v, m_ref, l_ref, acc_ref):
    """One online-softmax step.  qs: (H,tq,hd) pre-scaled; k/v: (tkv,H,hd)."""
    kh = jnp.transpose(k, (1, 0, 2))                         # (H, tkv, hd)
    vh = jnp.transpose(v, (1, 0, 2))
    s = jnp.einsum("hqd,hkd->hqk", qs, kh,
                   preferred_element_type=jnp.float32)       # (H, tq, tkv) f32
    m_prev = m_ref[...]
    m_new = jnp.maximum(m_prev, s.max(axis=-1, keepdims=True))
    alpha = jnp.exp(m_prev - m_new)
    p = jnp.exp(s - m_new)
    l_ref[...] = alpha * l_ref[...] + p.sum(axis=-1, keepdims=True)
    acc_ref[...] = alpha * acc_ref[...] + jnp.einsum(
        "hqk,hkd->hqd", p.astype(vh.dtype), vh,
        preferred_element_type=jnp.float32)
    m_ref[...] = m_new


def _finalize(o_ref, l_ref, acc_ref):
    # Exact reciprocal: runs once per (batch, q-tile) -> negligible cost,
    # keeps the result tight vs. the reference.
    o = acc_ref[...] / l_ref[...]                            # (H, tq, hd) f32
    h, tq, d = o.shape
    # Single lane-dense store: (H, tq, hd) -> (tq, H*hd).
    o = jnp.transpose(o, (1, 0, 2)).reshape(tq, h * d)
    o_ref[...] = o.astype(o_ref.dtype)


# ----------------------------------------------------------------------------
# Kernel 2: main-modality attention over the joint (concatenated) sequence.
# q/k/v are sliced out of one (B, S, 3, H, hd) array via the BlockSpecs.
# ----------------------------------------------------------------------------
def _flash_kernel(q_ref, k_ref, v_ref, o_ref, qs_ref, m_ref, l_ref, acc_ref,
                  *, scale):
    kv = pl.program_id(2)

    @pl.when(kv == 0)
    def _():
        _init_and_stage_q(q_ref, qs_ref, m_ref, l_ref, acc_ref, scale)

    _online_update(qs_ref[...], k_ref[...], v_ref[...], m_ref, l_ref, acc_ref)

    @pl.when(kv == pl.num_programs(2) - 1)
    def _():
        _finalize(o_ref, l_ref, acc_ref)


def flash_attention_qkv(qkv, *, q_block=None, kv_block=None):
    """qkv: (B, S, 3, H, hd) -> attention output (B, S, H*hd)."""
    b, s, _, h, d = qkv.shape
    dim = h * d
    tq = _pick_seq_tile(s, q_block, 256)
    tkv = _pick_seq_tile(s, kv_block, 512)
    n_q, n_kv = s // tq, s // tkv
    scale = 1.0 / float(d) ** 0.5
    return pl.pallas_call(
        functools.partial(_flash_kernel, scale=scale),
        out_shape=jax.ShapeDtypeStruct((b, s, dim), qkv.dtype),
        grid=(b, n_q, n_kv),
        in_specs=[
            pl.BlockSpec((None, tq, None, h, d),
                         lambda bi, qi, kv: (bi, qi, 0, 0, 0)),
            pl.BlockSpec((None, tkv, None, h, d),
                         lambda bi, qi, kv: (bi, kv, 1, 0, 0)),
            pl.BlockSpec((None, tkv, None, h, d),
                         lambda bi, qi, kv: (bi, kv, 2, 0, 0)),
        ],
        out_specs=pl.BlockSpec((None, tq, dim),
                               lambda bi, qi, kv: (bi, qi, 0)),
        scratch_shapes=[
            pltpu.VMEM((h, tq, d), qkv.dtype),    # scaled, head-major q
            pltpu.VMEM((h, tq, 1), jnp.float32),  # m
            pltpu.VMEM((h, tq, 1), jnp.float32),  # l
            pltpu.VMEM((h, tq, d), jnp.float32),  # acc
        ],
        compiler_params=pltpu.CompilerParams(
            dimension_semantics=("parallel", "parallel", "arbitrary")),
    )(qkv, qkv, qkv)


# ----------------------------------------------------------------------------
# Kernel 3: aux-modality attention over [main K/V ++ own K/V] WITHOUT ever
# materializing the concatenation: the kv grid axis walks n_main main blocks
# followed by n_aux aux blocks.
# ----------------------------------------------------------------------------
def _aux_flash_kernel(q_ref, km_ref, vm_ref, ka_ref, va_ref, o_ref,
                      qs_ref, m_ref, l_ref, acc_ref, *, scale, n_main):
    kv = pl.program_id(2)

    @pl.when(kv == 0)
    def _():
        _init_and_stage_q(q_ref, qs_ref, m_ref, l_ref, acc_ref, scale)

    @pl.when(kv < n_main)
    def _():
        _online_update(qs_ref[...], km_ref[...], vm_ref[...],
                       m_ref, l_ref, acc_ref)

    @pl.when(kv >= n_main)
    def _():
        _online_update(qs_ref[...], ka_ref[...], va_ref[...],
                       m_ref, l_ref, acc_ref)

    @pl.when(kv == pl.num_programs(2) - 1)
    def _():
        _finalize(o_ref, l_ref, acc_ref)


def aux_flash_attention_qkv(aux_qkv, main_qkv, *, q_block=None, kv_block=None):
    """aux_qkv: (B, Sa, 3, H, hd), main_qkv: (B, Sm, 3, H, hd)
    -> (B, Sa, H*hd): attention of aux q over concat([main K/V, aux K/V])."""
    b, sa, _, h, d = aux_qkv.shape
    sm = main_qkv.shape[1]
    dim = h * d
    tq = _pick_seq_tile(sa, q_block, 256)
    tkm = _pick_seq_tile(sm, kv_block, 512)
    tka = _pick_seq_tile(sa, kv_block, 512)
    n_q = sa // tq
    n_main = sm // tkm
    n_aux = sa // tka
    last_main = n_main - 1
    scale = 1.0 / float(d) ** 0.5
    return pl.pallas_call(
        functools.partial(_aux_flash_kernel, scale=scale, n_main=n_main),
        out_shape=jax.ShapeDtypeStruct((b, sa, dim), aux_qkv.dtype),
        grid=(b, n_q, n_main + n_aux),
        in_specs=[
            pl.BlockSpec((None, tq, None, h, d),
                         lambda bi, qi, kv: (bi, qi, 0, 0, 0)),
            # main K/V: walk blocks while kv < n_main; clamped afterwards so
            # the (unused) block is not re-fetched on the aux steps.
            pl.BlockSpec((None, tkm, None, h, d),
                         lambda bi, qi, kv: (bi, jnp.minimum(kv, last_main), 1, 0, 0)),
            pl.BlockSpec((None, tkm, None, h, d),
                         lambda bi, qi, kv: (bi, jnp.minimum(kv, last_main), 2, 0, 0)),
            # aux K/V: clamped to 0 during the main steps, then walk blocks.
            pl.BlockSpec((None, tka, None, h, d),
                         lambda bi, qi, kv: (bi, jnp.maximum(kv - n_main, 0), 1, 0, 0)),
            pl.BlockSpec((None, tka, None, h, d),
                         lambda bi, qi, kv: (bi, jnp.maximum(kv - n_main, 0), 2, 0, 0)),
        ],
        out_specs=pl.BlockSpec((None, tq, dim),
                               lambda bi, qi, kv: (bi, qi, 0)),
        scratch_shapes=[
            pltpu.VMEM((h, tq, d), aux_qkv.dtype),
            pltpu.VMEM((h, tq, 1), jnp.float32),
            pltpu.VMEM((h, tq, 1), jnp.float32),
            pltpu.VMEM((h, tq, d), jnp.float32),
        ],
        compiler_params=pltpu.CompilerParams(
            dimension_semantics=("parallel", "parallel", "arbitrary")),
    )(aux_qkv, main_qkv, main_qkv, aux_qkv, aux_qkv)


# ----------------------------------------------------------------------------
# Multimodal forward (glue in plain JAX; matmuls / softmax in Pallas kernels).
# ----------------------------------------------------------------------------
def multimodal_attention(xs, params, *, num_heads, num_main_modalities,
                         q_block=None, kv_block=None):
    num_modalities = len(xs)
    bsz, _, dim = xs[0].shape
    head_dim = dim // num_heads
    seqlens = [x.shape[1] for x in xs]

    # Per-modality QKV projection.  The (B*S, 3*dim) output reshapes for FREE
    # to (B, S, 3, H, hd) -> no HBM transpose of Q/K/V anywhere.
    qkvs = []
    for i, x in enumerate(xs):
        b, s, d_ = x.shape
        y = linear(x.reshape(b * s, d_), params["qkv_w"][i], params["qkv_b"][i])
        qkvs.append(y.reshape(b, s, 3, num_heads, head_dim))

    # --- main modalities: joint attention over the concatenated sequence ---
    main_qkv = jnp.concatenate(qkvs[:num_main_modalities], axis=1)
    main_o = flash_attention_qkv(main_qkv, q_block=q_block,
                                 kv_block=kv_block)            # (B, Sm, dim)

    outs, off = [], 0
    for s in seqlens[:num_main_modalities]:
        outs.append(main_o[:, off:off + s, :])
        off += s

    # --- aux modalities: attend over main K/V + own K/V (no concat in HBM) ---
    for i in range(num_main_modalities, num_modalities):
        outs.append(aux_flash_attention_qkv(qkvs[i], main_qkv,
                                            q_block=q_block,
                                            kv_block=kv_block))  # (B, Sa, dim)

    # --- per-modality output projection ---
    results = []
    for i, o in enumerate(outs):
        b, s, d_ = o.shape
        y = linear(o.reshape(b * s, d_), params["proj_w"][i], params["proj_b"][i])
        results.append(y.reshape(b, s, d_))
    return results


# ----------------------------------------------------------------------------
# Pure-JAX reference (for correctness check).
# ----------------------------------------------------------------------------
def reference(xs, params, *, num_heads, num_main_modalities):
    num_modalities = len(xs)
    seqlens = [x.shape[1] for x in xs]
    qs, ks, vs = [], [], []
    for i, x in enumerate(xs):
        b, s, d = x.shape
        hd = d // num_heads
        qkv = x @ params["qkv_w"][i] + params["qkv_b"][i][0]
        qkv = qkv.reshape(b, s, 3, num_heads, hd)
        qkv = jnp.transpose(qkv, (2, 0, 3, 1, 4))              # (3, B, H, S, hd)
        qs.append(qkv[0]); ks.append(qkv[1]); vs.append(qkv[2])

    def ref_sdpa(q, k, v):
        scale = 1.0 / float(q.shape[-1]) ** 0.5
        s = jnp.einsum("bhqd,bhkd->bhqk", q, k) * scale
        p = jax.nn.softmax(s, axis=-1)
        return jnp.einsum("bhqk,bhkd->bhqd", p, v)

    main_q = jnp.concatenate(qs[:num_main_modalities], axis=2)
    main_k = jnp.concatenate(ks[:num_main_modalities], axis=2)
    main_v = jnp.concatenate(vs[:num_main_modalities], axis=2)
    mo = ref_sdpa(main_q, main_k, main_v)
    b, h, sm, hd = mo.shape
    mo = jnp.transpose(mo, (0, 2, 1, 3)).reshape(b, sm, h * hd)
    outs, off = [], 0
    for s in seqlens[:num_main_modalities]:
        outs.append(mo[:, off:off + s, :]); off += s
    for i in range(num_main_modalities, num_modalities):
        oi = ref_sdpa(qs[i], jnp.concatenate([main_k, ks[i]], axis=2),
                      jnp.concatenate([main_v, vs[i]], axis=2))
        sa = oi.shape[2]
        outs.append(jnp.transpose(oi, (0, 2, 1, 3)).reshape(b, sa, h * hd))
    return [o @ params["proj_w"][i] + params["proj_b"][i][0]
            for i, o in enumerate(outs)]


if __name__ == "__main__":
    dim, num_heads = 128, 2          # head_dim = 64 (lane-friendly)
    num_main, num_aux = 2, 1
    num_modalities = num_main + num_aux
    batch = 2
    seqlens = [16, 24, 8]            # per-modality sequence lengths

    key = jax.random.PRNGKey(0)

    params = {"qkv_w": [], "qkv_b": [], "proj_w": [], "proj_b": []}
    for i in range(num_modalities):
        params["qkv_w"].append(0.05 * jax.random.normal(
            jax.random.fold_in(key, 10 + i), (dim, 3 * dim), jnp.float32))
        params["qkv_b"].append(0.05 * jax.random.normal(
            jax.random.fold_in(key, 20 + i), (1, 3 * dim), jnp.float32))
        params["proj_w"].append(0.05 * jax.random.normal(
            jax.random.fold_in(key, 30 + i), (dim, dim), jnp.float32))
        params["proj_b"].append(0.05 * jax.random.normal(
            jax.random.fold_in(key, 40 + i), (1, dim), jnp.float32))

    xs = [jax.random.normal(jax.random.fold_in(key, 100 + i),
                            (batch, s, dim), jnp.float32)
          for i, s in enumerate(seqlens)]

    # q_block=8 / kv_block=8 exercise the multi-tile online-softmax paths:
    # main attention grid (B, 5, 5); aux attention grid (B, 1, 5 + 1).
    outs = multimodal_attention(xs, params, num_heads=num_heads,
                                num_main_modalities=num_main,
                                q_block=8, kv_block=8)
    outs = jax.block_until_ready(outs)

    refs = reference(xs, params, num_heads=num_heads,
                     num_main_modalities=num_main)
    for o, r in zip(outs, refs):
        assert o.shape == r.shape, (o.shape, r.shape)
        err = float(jnp.max(jnp.abs(o - r)))
        assert err < 2e-3, err

    print("KERNEL_OK")
</pallas_src>

<mosaic_0001>
module attributes {stable_mosaic.version = 11 : i64} {
  func.func @_linear_kernel(%arg0: i32, %arg1: i32, %arg2: i32, %arg3: memref<32x128xf32, #tpu.memory_space<vmem>>, %arg4: memref<128x384xf32, #tpu.memory_space<vmem>>, %arg5: memref<1x384xf32, #tpu.memory_space<vmem>>, %arg6: memref<32x384xf32, #tpu.memory_space<vmem>>, %arg7: memref<32x384xf32, #tpu.memory_space<vmem>>) attributes {dimension_semantics = [#tpu.dimension_semantics<parallel>, #tpu.dimension_semantics<parallel>, #tpu.dimension_semantics<arbitrary>], iteration_bounds = array<i64: 1, 1, 1>, scalar_prefetch = 0 : i64, scratch_operands = 1 : i64, tpu.core_type = #tpu.core_type<tc>, window_params = [{transform_indices = @transform_0, window_bounds = array<i64: 32, 128>}, {transform_indices = @transform_1, window_bounds = array<i64: 128, 384>}, {transform_indices = @transform_2, window_bounds = array<i64: 1, 384>}, {transform_indices = @transform_3, window_bounds = array<i64: 32, 384>}]} {
    %c0_i32 = arith.constant 0 : i32
    %0 = arith.cmpi eq, %arg2, %c0_i32 : i32
    %1 = arith.extui %0 : i1 to i32
    %c0_i32_0 = arith.constant 0 : i32
    %2 = arith.cmpi ne, %1, %c0_i32_0 : i32
    scf.if %2 {
      %cst_10 = arith.constant 0.000000e+00 : f32
      %12 = vector.broadcast %cst_10 : f32 to vector<32x384xf32>
      %c0_11 = arith.constant 0 : index
      %c0_12 = arith.constant 0 : index
      %13 = vector.load %arg7[%c0_11, %c0_12] : memref<32x384xf32, #tpu.memory_space<vmem>>, vector<32x384xf32>
      tpu.vector_store %arg7[%c0_11, %c0_12], %12 {strides = array<i32>} : memref<32x384xf32, #tpu.memory_space<vmem>>, vector<32x384xf32>,
    } else {
    }
    %c0 = arith.constant 0 : index
    %c0_1 = arith.constant 0 : index
    %3 = vector.load %arg7[%c0, %c0_1] : memref<32x384xf32, #tpu.memory_space<vmem>>, vector<32x384xf32>
    %c0_2 = arith.constant 0 : index
    %c0_3 = arith.constant 0 : index
    %4 = vector.load %arg3[%c0_2, %c0_3] : memref<32x128xf32, #tpu.memory_space<vmem>>, vector<32x128xf32>
    %c0_4 = arith.constant 0 : index
    %c0_5 = arith.constant 0 : index
    %5 = vector.load %arg4[%c0_4, %c0_5] : memref<128x384xf32, #tpu.memory_space<vmem>>, vector<128x384xf32>
    %cst = arith.constant dense<0.000000e+00> : vector<32x384xf32>
    %6 = tpu.matmul %4, %5, %cst {dimension_numbers = #tpu.dot_dimension_numbers<[1], [0], [0], [1], [0, 0, 1, 1], [], []>} : vector<32x128xf32>, vector<128x384xf32>, vector<32x384xf32> -> vector<32x384xf32>
    %7 = arith.addf %3, %6 : vector<32x384xf32>
    %c0_6 = arith.constant 0 : index
    %c0_7 = arith.constant 0 : index
    %8 = vector.load %arg7[%c0_6, %c0_7] : memref<32x384xf32, #tpu.memory_space<vmem>>, vector<32x384xf32>
    tpu.vector_store %arg7[%c0_6, %c0_7], %7 {strides = array<i32>} : memref<32x384xf32, #tpu.memory_space<vmem>>, vector<32x384xf32>,
    %c0_i32_8 = arith.constant 0 : i32
    %9 = arith.cmpi eq, %arg2, %c0_i32_8 : i32
    %10 = arith.extui %9 : i1 to i32
    %c0_i32_9 = arith.constant 0 : i32
    %11 = arith.cmpi ne, %10, %c0_i32_9 : i32
    scf.if %11 {
      %c0_10 = arith.constant 0 : index
      %c0_11 = arith.constant 0 : index
      %12 = vector.load %arg7[%c0_10, %c0_11] : memref<32x384xf32, #tpu.memory_space<vmem>>, vector<32x384xf32>
      %c0_12 = arith.constant 0 : index
      %c0_13 = arith.constant 0 : index
      %13 = vector.load %arg5[%c0_12, %c0_13] : memref<1x384xf32, #tpu.memory_space<vmem>>, vector<1x384xf32>
      %14 = vector.broadcast %13 : vector<1x384xf32> to vector<32x384xf32>
      %15 = arith.addf %12, %14 : vector<32x384xf32>
      %c0_14 = arith.constant 0 : index
      %c0_15 = arith.constant 0 : index
      %16 = vector.load %arg6[%c0_14, %c0_15] : memref<32x384xf32, #tpu.memory_space<vmem>>, vector<32x384xf32>
      tpu.vector_store %arg6[%c0_14, %c0_15], %15 {strides = array<i32>} : memref<32x384xf32, #tpu.memory_space<vmem>>, vector<32x384xf32>,
    } else {
    }
    return
  }
  func.func @transform_0(%arg0: i32, %arg1: i32, %arg2: i32) -> (i32, i32) {
    %c0_i32 = arith.constant 0 : i32
    return %arg0, %arg2 : i32, i32
  }
  func.func @transform_1(%arg0: i32, %arg1: i32, %arg2: i32) -> (i32, i32) {
    %c0_i32 = arith.constant 0 : i32
    return %arg2, %arg1 : i32, i32
  }
  func.func @transform_2(%arg0: i32, %arg1: i32, %arg2: i32) -> (i32, i32) {
    %c0_i32 = arith.constant 0 : i32
    %c0_i32_0 = arith.constant 0 : i32
    return %c0_i32, %arg1 : i32, i32
  }
  func.func @transform_3(%arg0: i32, %arg1: i32, %arg2: i32) -> (i32, i32) {
    %c0_i32 = arith.constant 0 : i32
    return %arg0, %arg1 : i32, i32
  }
}

</mosaic_0001>

<llo_original>
// kernel: tpu_custom_call.1
$region0: #{tpu_custom_call.1}
  #allocation0 [shape = 'u32[]', space=smem, size = 0x4, offset = 0x4, fixed_abs, tag = 'smem constant byte address 0x4 - core index']
  #allocation1 [shape = 'u32[72,128]{1,0:T(1,128)}', space=vmem, size = 0x9000, scoped, tag = 'internal scratch']
  #allocation2 [shape = 'f32[32,384]{1,0:T(8,128)}', space=vmem, size = 0xc000, scoped, tag = 'scratch operand']
  %s0 = inlined_call_operand.hbm [shape: f32[32,128], index: 0, kind: input, shape index: {}]
  %s1 = inlined_call_operand.hbm [shape: f32[128,384], index: 1, kind: input, shape index: {}]
  %s2 = inlined_call_operand.hbm [shape: f32[1,384], index: 2, kind: input, shape index: {}]
  %s3 = inlined_call_operand.hbm [shape: f32[32,384], index: 3, kind: output, shape index: {}]
  %s4 = sld [smem:[#allocation0]]
  $region42: #{tpu_custom_call.1} parent=0
    _
  %s6 = ssub.s32 1, %s4
  %s7 = scalar_select 0, %s6, %s4
  $region1: #{tpu_custom_call.1} parent=0
    #allocation3 [shape = 'u8[16384]{0}', space=vmem, size = 0x4000, scoped, tag = 'input window, operand 0, single buffered']
    #allocation4 [shape = 's32[1]{0}', space=sflag, size = 0x4, scoped, tag = 'scoped memory for tpu_custom_call.1']
    #allocation5 [shape = 's32[1]{0}', space=sflag, size = 0x4, scoped, tag = 'scoped memory for tpu_custom_call.1']
    #allocation6 [shape = 'u8[196608]{0}', space=vmem, size = 0x30000, scoped, tag = 'input window, operand 1, single buffered']
    #allocation7 [shape = 's32[1]{0}', space=sflag, size = 0x4, scoped, tag = 'scoped memory for tpu_custom_call.1']
    #allocation8 [shape = 'u8[1536]{0}', space=vmem, size = 0x800, scoped, tag = 'input window, operand 2, single buffered']
    #allocation9 [shape = 'u8[49152]{0}', space=vmem, size = 0xc000, scoped, tag = 'output window, operand 0, single buffered']
    %8 = vsyncpa [#allocation4], 0
    %9 = vsyncpa [#allocation7], 0
    %10 = vsyncpa [#allocation5], 0
    // Predicated region
    $region2: #{tpu_custom_call.1} parent=1 // pred_check
      _
    $region3: #{tpu_custom_call.1} parent=1 // pred_check_branch
      %12 = sbr.rel (0) target = $region5
    $region4: #{tpu_custom_call.1} parent=1 // pred_region
      %14 = vsyncadd [#allocation4], 0
      %s15 = sshll.u32 %s0, 4
      %s16 = int_to_ptr.hbm [resolvable:$true] %s15
      %s17 = sshll.u32 [#allocation3], 4
      %s18 = int_to_ptr.vmem [resolvable:$true] %s17
      %23 = dma.hbm_to_vmem [thread:$0]  %s16, 512, %s18, [#allocation4], 128, 128, 8
    $region5: #{tpu_custom_call.1} parent=1 // pred_fallthru
      _
    // Predicated region
    $region6: #{tpu_custom_call.1} parent=1 // pred_check
      _
    $region7: #{tpu_custom_call.1} parent=1 // pred_check_branch
      %25 = sbr.rel (0) target = $region9
    $region8: #{tpu_custom_call.1} parent=1 // pred_region
      %27 = vsyncadd [#allocation7], 0
      %s28 = sshll.u32 %s1, 4
      %s29 = int_to_ptr.hbm [resolvable:$true] %s28
      %s30 = sshll.u32 [#allocation6], 4
      %s31 = int_to_ptr.vmem [resolvable:$true] %s30
      %36 = dma.hbm_to_vmem [thread:$0]  %s29, 6144, %s31, [#allocation7], 384, 384, 24
    $region9: #{tpu_custom_call.1} parent=1 // pred_fallthru
      _
    // Predicated region
    $region10: #{tpu_custom_call.1} parent=1 // pred_check
      _
    $region11: #{tpu_custom_call.1} parent=1 // pred_check_branch
      %38 = sbr.rel (0) target = $region13
    $region12: #{tpu_custom_call.1} parent=1 // pred_region
      %40 = vsyncadd [#allocation7], 0
      %s42 = sshll.u32 %s2, 4
      %s43 = int_to_ptr.hbm [resolvable:$true] %s42
      %s44 = sshll.u32 [#allocation8], 4
      %s45 = int_to_ptr.vmem [resolvable:$true] %s44
      %47 = dma.hbm_to_vmem [thread:$0]  %s43, 48, %s45, [#allocation7]
    $region13: #{tpu_custom_call.1} parent=1 // pred_fallthru
      _
    // Predicated region
    $region14: #{tpu_custom_call.1} parent=1 // pred_check
      _
    $region15: #{tpu_custom_call.1} parent=1 // pred_check_branch
      %49 = sbr.rel (0) target = $region17
    $region16: #{tpu_custom_call.1} parent=1 // pred_region
      %51 = dma.done [#allocation4], 512
    $region17: #{tpu_custom_call.1} parent=1 // pred_fallthru
      _
    // Predicated region
    $region18: #{tpu_custom_call.1} parent=1 // pred_check
      _
    $region19: #{tpu_custom_call.1} parent=1 // pred_check_branch
      %53 = sbr.rel (0) target = $region21
    $region20: #{tpu_custom_call.1} parent=1 // pred_region
      %55 = dma.done [#allocation7], 6144
    $region21: #{tpu_custom_call.1} parent=1 // pred_fallthru
      _
    // Predicated region
    $region22: #{tpu_custom_call.1} parent=1 // pred_check
      _
    $region23: #{tpu_custom_call.1} parent=1 // pred_check_branch
      %57 = sbr.rel (0) target = $region25
    $region24: #{tpu_custom_call.1} parent=1 // pred_region
      %59 = dma.done [#allocation7], 48
    $region25: #{tpu_custom_call.1} parent=1 // pred_fallthru
      _
    %p60 = scmp.eq.s32.totalorder 0, 0
    // Predicated region
    $region26: #{tpu_custom_call.1} parent=1 // pred_check
      %p61 = pneg %p60
    $region27: #{tpu_custom_call.1} parent=1 // pred_check_branch
      %63 = sbr.rel (%p61) target = $region29
    $region28: #{tpu_custom_call.1} parent=1 // pred_region
      %64 = vst [vmem:[#allocation2] sm:$0xff] 0.0
      %65 = vst [vmem:[#allocation2 + $0x8] sm:$0xff] 0.0
      %66 = vst [vmem:[#allocation2 + $0x10] sm:$0xff] 0.0
      %67 = vst [vmem:[#allocation2 + $0x18] sm:$0xff] 0.0
      %68 = vst [vmem:[#allocation2 + $0x20] sm:$0xff] 0.0
      %69 = vst [vmem:[#allocation2 + $0x28] sm:$0xff] 0.0
      %70 = vst [vmem:[#allocation2 + $0x30] sm:$0xff] 0.0
      %71 = vst [vmem:[#allocation2 + $0x38] sm:$0xff] 0.0
      %72 = vst [vmem:[#allocation2 + $0x40] sm:$0xff] 0.0
      %73 = vst [vmem:[#allocation2 + $0x48] sm:$0xff] 0.0
      %74 = vst [vmem:[#allocation2 + $0x50] sm:$0xff] 0.0
      %75 = vst [vmem:[#allocation2 + $0x58] sm:$0xff] 0.0
    $region29: #{tpu_custom_call.1} parent=1 // pred_fallthru
      _
    %v76 = vld [vmem:[#allocation2] sm:$0xff]
    %v77 = vld [vmem:[#allocation2 + $0x8] sm:$0xff]
    %v78 = vld [vmem:[#allocation2 + $0x10] sm:$0xff]
    %v79 = vld [vmem:[#allocation2 + $0x18] sm:$0xff]
    %v80 = vld [vmem:[#allocation2 + $0x20] sm:$0xff]
    %v81 = vld [vmem:[#allocation2 + $0x28] sm:$0xff]
    %v82 = vld [vmem:[#allocation2 + $0x30] sm:$0xff]
    %v83 = vld [vmem:[#allocation2 + $0x38] sm:$0xff]
    %v84 = vld [vmem:[#allocation2 + $0x40] sm:$0xff]
    %v85 = vld [vmem:[#allocation2 + $0x48] sm:$0xff]
    %v86 = vld [vmem:[#allocation2 + $0x50] sm:$0xff]
    %v87 = vld [vmem:[#allocation2 + $0x58] sm:$0xff]
    %v88 = vld [vmem:[#allocation3] sm:$0xff]
    %v89 = vld [vmem:[#allocation3 + $0x8] sm:$0xff]
    %v90 = vld [vmem:[#allocation3 + $0x10] sm:$0xff]
    %v91 = vld [vmem:[#allocation3 + $0x18] sm:$0xff]
    %v92 = vld [vmem:[#allocation6] sm:$0xff]
    %v93 = vld [vmem:[#allocation6 + $0x8] sm:$0xff]
    %v94 = vld [vmem:[#allocation6 + $0x10] sm:$0xff]
    %v95 = vld [vmem:[#allocation6 + $0x18] sm:$0xff]
    %v96 = vld [vmem:[#allocation6 + $0x20] sm:$0xff]
    %v97 = vld [vmem:[#allocation6 + $0x28] sm:$0xff]
    %v98 = vld [vmem:[#allocation6 + $0x30] sm:$0xff]
    %v99 = vld [vmem:[#allocation6 + $0x38] sm:$0xff]
    %v100 = vld [vmem:[#allocation6 + $0x40] sm:$0xff]
    %v101 = vld [vmem:[#allocation6 + $0x48] sm:$0xff]
    %v102 = vld [vmem:[#allocation6 + $0x50] sm:$0xff]
    %v103 = vld [vmem:[#allocation6 + $0x58] sm:$0xff]
    %v104 = vld [vmem:[#allocation6 + $0x60] sm:$0xff]
    %v105 = vld [vmem:[#allocation6 + $0x68] sm:$0xff]
    %v106 = vld [vmem:[#allocation6 + $0x70] sm:$0xff]
    %v107 = vld [vmem:[#allocation6 + $0x78] sm:$0xff]
    %v108 = vld [vmem:[#allocation6 + $0x80] sm:$0xff]
    %v109 = vld [vmem:[#allocation6 + $0x88] sm:$0xff]
    %v110 = vld [vmem:[#allocation6 + $0x90] sm:$0xff]
    %v111 = vld [vmem:[#allocation6 + $0x98] sm:$0xff]
    %v112 = vld [vmem:[#allocation6 + $0xa0] sm:$0xff]
    %v113 = vld [vmem:[#allocation6 + $0xa8] sm:$0xff]
    %v114 = vld [vmem:[#allocation6 + $0xb0] sm:$0xff]
    %v115 = vld [vmem:[#allocation6 + $0xb8] sm:$0xff]
    %v116 = vld [vmem:[#allocation6 + $0xc0] sm:$0xff]
    %v117 = vld [vmem:[#allocation6 + $0xc8] sm:$0xff]
    %v118 = vld [vmem:[#allocation6 + $0xd0] sm:$0xff]
    %v119 = vld [vmem:[#allocation6 + $0xd8] sm:$0xff]
    %v120 = vld [vmem:[#allocation6 + $0xe0] sm:$0xff]
    %v121 = vld [vmem:[#allocation6 + $0xe8] sm:$0xff]
    %v122 = vld [vmem:[#allocation6 + $0xf0] sm:$0xff]
    %v123 = vld [vmem:[#allocation6 + $0xf8] sm:$0xff]
    %v124 = vld [vmem:[#allocation6 + $0x100] sm:$0xff]
    %v125 = vld [vmem:[#allocation6 + $0x108] sm:$0xff]
    %v126 = vld [vmem:[#allocation6 + $0x110] sm:$0xff]
    %v127 = vld [vmem:[#allocation6 + $0x118] sm:$0xff]
    %v128 = vld [vmem:[#allocation6 + $0x120] sm:$0xff]
    %v129 = vld [vmem:[#allocation6 + $0x128] sm:$0xff]
    %v130 = vld [vmem:[#allocation6 + $0x130] sm:$0xff]
    %v131 = vld [vmem:[#allocation6 + $0x138] sm:$0xff]
    %v132 = vld [vmem:[#allocation6 + $0x140] sm:$0xff]
    %v133 = vld [vmem:[#allocation6 + $0x148] sm:$0xff]
    %v134 = vld [vmem:[#allocation6 + $0x150] sm:$0xff]
    %v135 = vld [vmem:[#allocation6 + $0x158] sm:$0xff]
    %v136 = vld [vmem:[#allocation6 + $0x160] sm:$0xff]
    %v137 = vld [vmem:[#allocation6 + $0x168] sm:$0xff]
    %v138 = vld [vmem:[#allocation6 + $0x170] sm:$0xff]
    %v139 = vld [vmem:[#allocation6 + $0x178] sm:$0xff]
    %140 = vmatpush.msra.mxu0 %v137
    %141 = vmatpush.msra.mxu0 %v134
    %142 = vmatpush.msra.mxu0 %v131
    %143 = vmatpush.msra.mxu0 %v128
    %144 = vmatpush.msra.mxu0 %v125
    %145 = vmatpush.msra.mxu0 %v122
    %146 = vmatpush.msra.mxu0 %v119
    %147 = vmatpush.msra.mxu0 %v116
    %148 = vmatpush.msra.mxu0 %v113
    %149 = vmatpush.msra.mxu0 %v110
    %150 = vmatpush.msra.mxu0 %v107
    %151 = vmatpush.msra.mxu0 %v104
    %152 = vmatpush.msra.mxu0 %v101
    %153 = vmatpush.msra.mxu0 %v98
    %154 = vmatpush.msra.mxu0 %v95
    %155 = vmatpush.msra.mxu0 %v92
    %156 = vmatmul.f32.gmra.mxu0 %v88
    %v157 = vpop.f32.mrf.mxu0
    %v158 = vadd.f32 0.0, %v157
    %159 = vmatmul.f32.gmra.mxu0 %v89
    %v160 = vpop.f32.mrf.mxu0
    %v161 = vadd.f32 0.0, %v160
    %162 = vmatmul.f32.gmra.mxu0 %v90
    %v163 = vpop.f32.mrf.mxu0
    %v164 = vadd.f32 0.0, %v163
    %165 = vmatmul.f32.gmra.mxu0 %v91
    %v166 = vpop.f32.mrf.mxu0
    %v167 = vadd.f32 0.0, %v166
    %168 = vdwg.mxu0
    %169 = vmatpush.msra.mxu0 %v138
    %170 = vmatpush.msra.mxu0 %v135
    %171 = vmatpush.msra.mxu0 %v132
    %172 = vmatpush.msra.mxu0 %v129
    %173 = vmatpush.msra.mxu0 %v126
    %174 = vmatpush.msra.mxu0 %v123
    %175 = vmatpush.msra.mxu0 %v120
    %176 = vmatpush.msra.mxu0 %v117
    %177 = vmatpush.msra.mxu0 %v114
    %178 = vmatpush.msra.mxu0 %v111
    %179 = vmatpush.msra.mxu0 %v108
    %180 = vmatpush.msra.mxu0 %v105
    %181 = vmatpush.msra.mxu0 %v102
    %182 = vmatpush.msra.mxu0 %v99
    %183 = vmatpush.msra.mxu0 %v96
    %184 = vmatpush.msra.mxu0 %v93
    %185 = vmatmul.f32.gmra.mxu0 %v88
    %v186 = vpop.f32.mrf.mxu0
    %v187 = vadd.f32 0.0, %v186
    %188 = vmatmul.f32.gmra.mxu0 %v89
    %v189 = vpop.f32.mrf.mxu0
    %v190 = vadd.f32 0.0, %v189
    %191 = vmatmul.f32.gmra.mxu0 %v90
    %v192 = vpop.f32.mrf.mxu0
    %v193 = vadd.f32 0.0, %v192
    %194 = vmatmul.f32.gmra.mxu0 %v91
    %v195 = vpop.f32.mrf.mxu0
    %v196 = vadd.f32 0.0, %v195
    %197 = vdwg.mxu0
    %198 = vmatpush.msra.mxu0 %v139
    %199 = vmatpush.msra.mxu0 %v136
    %200 = vmatpush.msra.mxu0 %v133
    %201 = vmatpush.msra.mxu0 %v130
    %202 = vmatpush.msra.mxu0 %v127
    %203 = vmatpush.msra.mxu0 %v124
    %204 = vmatpush.msra.mxu0 %v121
    %205 = vmatpush.msra.mxu0 %v118
    %206 = vmatpush.msra.mxu0 %v115
    %207 = vmatpush.msra.mxu0 %v112
    %208 = vmatpush.msra.mxu0 %v109
    %209 = vmatpush.msra.mxu0 %v106
    %210 = vmatpush.msra.mxu0 %v103
    %211 = vmatpush.msra.mxu0 %v100
    %212 = vmatpush.msra.mxu0 %v97
    %213 = vmatpush.msra.mxu0 %v94
    %214 = vmatmul.f32.gmra.mxu0 %v88
    %v215 = vpop.f32.mrf.mxu0
    %v216 = vadd.f32 0.0, %v215
    %217 = vmatmul.f32.gmra.mxu0 %v89
    %v218 = vpop.f32.mrf.mxu0
    %v219 = vadd.f32 0.0, %v218
    %220 = vmatmul.f32.gmra.mxu0 %v90
    %v221 = vpop.f32.mrf.mxu0
    %v222 = vadd.f32 0.0, %v221
    %223 = vmatmul.f32.gmra.mxu0 %v91
    %v224 = vpop.f32.mrf.mxu0
    %v225 = vadd.f32 0.0, %v224
    %226 = vdwg.mxu0
    %v227 = vadd.f32 %v76, %v158
    %v228 = vadd.f32 %v77, %v187
    %v229 = vadd.f32 %v78, %v216
    %v230 = vadd.f32 %v79, %v161
    %v231 = vadd.f32 %v80, %v190
    %v232 = vadd.f32 %v81, %v219
    %v233 = vadd.f32 %v82, %v164
    %v234 = vadd.f32 %v83, %v193
    %v235 = vadd.f32 %v84, %v222
    %v236 = vadd.f32 %v85, %v167
    %v237 = vadd.f32 %v86, %v196
    %v238 = vadd.f32 %v87, %v225
    %239 = vst [vmem:[#allocation2] sm:$0xff] %v227
    %240 = vst [vmem:[#allocation2 + $0x8] sm:$0xff] %v228
    %241 = vst [vmem:[#allocation2 + $0x10] sm:$0xff] %v229
    %242 = vst [vmem:[#allocation2 + $0x18] sm:$0xff] %v230
    %243 = vst [vmem:[#allocation2 + $0x20] sm:$0xff] %v231
    %244 = vst [vmem:[#allocation2 + $0x28] sm:$0xff] %v232
    %245 = vst [vmem:[#allocation2 + $0x30] sm:$0xff] %v233
    %246 = vst [vmem:[#allocation2 + $0x38] sm:$0xff] %v234
    %247 = vst [vmem:[#allocation2 + $0x40] sm:$0xff] %v235
    %248 = vst [vmem:[#allocation2 + $0x48] sm:$0xff] %v236
    %249 = vst [vmem:[#allocation2 + $0x50] sm:$0xff] %v237
    %250 = vst [vmem:[#allocation2 + $0x58] sm:$0xff] %v238
    // Predicated region
    $region30: #{tpu_custom_call.1} parent=1 // pred_check
      %p251 = pneg %p60
    $region31: #{tpu_custom_call.1} parent=1 // pred_check_branch
      %253 = sbr.rel (%p251) target = $region33
    $region32: #{tpu_custom_call.1} parent=1 // pred_region
      %v254 = vld [vmem:[#allocation2] sm:$0xff]
      %v255 = vld [vmem:[#allocation2 + $0x8] sm:$0xff]
      %v256 = vld [vmem:[#allocation2 + $0x10] sm:$0xff]
      %v257 = vld [vmem:[#allocation2 + $0x18] sm:$0xff]
      %v258 = vld [vmem:[#allocation2 + $0x20] sm:$0xff]
      %v259 = vld [vmem:[#allocation2 + $0x28] sm:$0xff]
      %v260 = vld [vmem:[#allocation2 + $0x30] sm:$0xff]
      %v261 = vld [vmem:[#allocation2 + $0x38] sm:$0xff]
      %v262 = vld [vmem:[#allocation2 + $0x40] sm:$0xff]
      %v263 = vld [vmem:[#allocation2 + $0x48] sm:$0xff]
      %v264 = vld [vmem:[#allocation2 + $0x50] sm:$0xff]
      %v265 = vld [vmem:[#allocation2 + $0x58] sm:$0xff]
      %v266 = vld [vmem:[#allocation8] sm:$0x7]
      %v268 = vperm.slane %v266, 0
      %v269 = vperm.slane %v266, 1
      %v270 = vperm.slane %v266, 2
      %v274 = vadd.f32 %v254, %v268
      %v275 = vadd.f32 %v255, %v269
      %v276 = vadd.f32 %v256, %v270
      %v277 = vadd.f32 %v257, %v268
      %v278 = vadd.f32 %v258, %v269
      %v279 = vadd.f32 %v259, %v270
      %v280 = vadd.f32 %v260, %v268
      %v281 = vadd.f32 %v261, %v269
      %v282 = vadd.f32 %v262, %v270
      %v283 = vadd.f32 %v263, %v268
      %v284 = vadd.f32 %v264, %v269
      %v285 = vadd.f32 %v265, %v270
      %286 = vst [vmem:[#allocation9] sm:$0xff] %v274
      %287 = vst [vmem:[#allocation9 + $0x8] sm:$0xff] %v275
      %288 = vst [vmem:[#allocation9 + $0x10] sm:$0xff] %v276
      %289 = vst [vmem:[#allocation9 + $0x18] sm:$0xff] %v277
      %290 = vst [vmem:[#allocation9 + $0x20] sm:$0xff] %v278
      %291 = vst [vmem:[#allocation9 + $0x28] sm:$0xff] %v279
      %292 = vst [vmem:[#allocation9 + $0x30] sm:$0xff] %v280
      %293 = vst [vmem:[#allocation9 + $0x38] sm:$0xff] %v281
      %294 = vst [vmem:[#allocation9 + $0x40] sm:$0xff] %v282
      %295 = vst [vmem:[#allocation9 + $0x48] sm:$0xff] %v283
      %296 = vst [vmem:[#allocation9 + $0x50] sm:$0xff] %v284
      %297 = vst [vmem:[#allocation9 + $0x58] sm:$0xff] %v285
    $region33: #{tpu_custom_call.1} parent=1 // pred_fallthru
      _
    // Predicated region
    $region34: #{tpu_custom_call.1} parent=1 // pred_check
      _
    $region35: #{tpu_custom_call.1} parent=1 // pred_check_branch
      %299 = sbr.rel (0) target = $region37
    $region36: #{tpu_custom_call.1} parent=1 // pred_region
      %301 = vsyncadd [#allocation5], 0
      %s302 = sshll.u32 [#allocation9], 4
      %s303 = int_to_ptr.vmem [resolvable:$true] %s302
      %s304 = sshll.u32 %s3, 4
      %s305 = int_to_ptr.hbm [resolvable:$true] %s304
      %310 = dma.vmem_to_hbm [thread:$0]  %s303, 1536, %s305, [#allocation5], 384, 384, 24
    $region37: #{tpu_custom_call.1} parent=1 // pred_fallthru
      _
    // Predicated region
    $region38: #{tpu_custom_call.1} parent=1 // pred_check
      _
    $region39: #{tpu_custom_call.1} parent=1 // pred_check_branch
      %312 = sbr.rel (0) target = $region41
    $region40: #{tpu_custom_call.1} parent=1 // pred_region
      %314 = dma.done [#allocation5], 1536
    $region41: #{tpu_custom_call.1} parent=1 // pred_fallthru
      _
    %315 = vsyncpa [#allocation4], 1
    %316 = vsyncpa [#allocation7], 1
    %317 = vsyncpa [#allocation5], 1

</llo_original>
